<compile_context>
chip_gen: v5e
topology: v5e:2x2
jax: 0.10.0
libtpu: 0.0.40
codegen_flags: <defaults>
</compile_context>

<pallas_src>
import functools

import jax
import jax.numpy as jnp
from jax.experimental import pallas as pl
from jax.experimental.pallas import tpu as pltpu

LANES = 128
SUBLANES = 8
CHUNK = SUBLANES * LANES                 # 1024-element alignment unit
TARGET_TILE_BYTES = 4 * 1024 * 1024      # per-block DMA size target
NUM_SLICES = 2                           # leading parallel axis (v7x: 2 TCs)
MIN_PALLAS_ELEMENTS = 1 << 20            # below this, plain -jnp.mean is faster


def _partial_sum_kernel(x_ref, o_ref, *, tile_rows, acc_rows, total_rows,
                        first_masked_tile):
    """Grid = (slice, step). Each slice accumulates its row-range partial sum
    into its own resident (1, acc_rows, 128) f32 output block."""
    c = pl.program_id(0)
    i = pl.program_id(1)
    steps = pl.num_programs(1)

    @pl.when(i == 0)
    def _():
        o_ref[...] = jnp.zeros_like(o_ref)

    # In-kernel cast (VPU, hidden under DMA) — input streams in its HBM dtype.
    x = x_ref[...].astype(jnp.float32)                  # (tile_rows, 128)

    def fold(v):
        # Pure sublane-wise VALU adds into acc_rows independent vregs — no
        # cross-lane work in the hot loop, no deep serial add chain.
        o_ref[...] += v.reshape(-1, acc_rows, LANES).sum(axis=0, keepdims=True)

    if first_masked_tile is None:
        fold(x)
    else:
        t = c * steps + i                               # global tile index

        @pl.when(t < first_masked_tile)
        def _():
            fold(x)                                     # full tiles: no mask

        @pl.when(t >= first_masked_tile)
        def _():
            # Ragged last real tile and/or grid-padding duplicate tiles:
            # zero out-of-range rows (select, not multiply: garbage may be NaN).
            row_ids = t * tile_rows + jax.lax.broadcasted_iota(
                jnp.int32, x.shape, 0)
            fold(jnp.where(row_ids < total_rows, x, 0.0))


def generator_loss(gen_img_score, *, min_pallas_elements=MIN_PALLAS_ELEMENTS,
                   target_tile_bytes=TARGET_TILE_BYTES):
    """Equivalent of GeneratorLoss().forward(gen_img_score): -mean(x)."""
    x = jnp.asarray(gen_img_score)
    n = x.size
    if n == 0:
        # torch.mean of an empty tensor is nan; so is its negation.
        return jnp.float32(jnp.nan)
    is_float = jnp.issubdtype(x.dtype, jnp.floating)

    def finish(total_f32):
        loss = -(total_f32 / jnp.float32(n))
        return loss.astype(x.dtype) if is_float else loss

    # Small-input fast path: a single-step pallas_call only adds overhead.
    if n < min_pallas_elements:
        return finish(jnp.sum(x.astype(jnp.float32)))

    flat = x.reshape(-1)                        # metadata-only for contiguous x
    aligned = (n // CHUNK) * CHUNK
    tail_sum = jnp.float32(0.0)
    if aligned < n:
        # <1024-element remainder: tiny wrapper-side sum (no full-tensor pad).
        tail_sum = jnp.sum(flat[aligned:].astype(jnp.float32))
    if aligned == 0:
        return finish(tail_sum)

    slab = flat[:aligned].reshape(-1, LANES)    # (rows, 128), rows % 8 == 0
    rows = slab.shape[0]

    # Dtype-aware tile rows from a byte budget, rounded to the dtype's
    # sublane-tiling multiple (f32:8, bf16:16, int8/fp8:32).
    itemsize = x.dtype.itemsize
    sub_mult = max(SUBLANES, 32 // max(itemsize, 1))
    budget_rows = max(sub_mult,
                      (target_tile_bytes // (LANES * itemsize)) // sub_mult
                      * sub_mult)
    tile_rows = rows if rows <= budget_rows else budget_rows

    # Wide accumulator: largest power-of-two row fold <= 64 dividing tile_rows.
    acc_rows = next(d for d in (64, 32, 16, 8) if tile_rows % d == 0) \
        if tile_rows % 8 == 0 else tile_rows

    total_tiles = pl.cdiv(rows, tile_rows)
    num_slices = NUM_SLICES if total_tiles >= 2 else 1
    steps = pl.cdiv(total_tiles, num_slices)
    grid_tiles = num_slices * steps
    padded = grid_tiles > total_tiles           # grid covers duplicate tiles
    ragged = (rows % tile_rows) != 0            # last real tile is partial

    if ragged:
        first_masked_tile = total_tiles - 1
    elif padded:
        first_masked_tile = total_tiles
    else:
        first_masked_tile = None

    if padded:
        # Clamp duplicate tile indices to the last real block: the DMA stays
        # in bounds and the kernel masks their contribution to zero.
        def in_index_map(c, i):
            return (jnp.minimum(c * steps + i, total_tiles - 1), 0)
    else:
        def in_index_map(c, i):
            return (c * steps + i, 0)

    kernel = functools.partial(
        _partial_sum_kernel,
        tile_rows=tile_rows,
        acc_rows=acc_rows,
        total_rows=rows,
        first_masked_tile=first_masked_tile,
    )

    partials = pl.pallas_call(
        kernel,
        out_shape=jax.ShapeDtypeStruct((num_slices, acc_rows, LANES),
                                       jnp.float32),
        grid_spec=pltpu.PrefetchScalarGridSpec(
            num_scalar_prefetch=0,
            grid=(num_slices, steps),
            in_specs=[pl.BlockSpec((tile_rows, LANES), in_index_map)],
            out_specs=pl.BlockSpec((1, acc_rows, LANES),
                                   lambda c, i: (c, 0, 0)),
        ),
        compiler_params=pltpu.CompilerParams(
            dimension_semantics=("parallel", "arbitrary"),
        ),
    )(slab)

    return finish(jnp.sum(partials) + tail_sum)


if __name__ == "__main__":
    key = jax.random.PRNGKey(0)
    k1, k2, k3 = jax.random.split(key, 3)

    # PatchGAN-style discriminator scores for the generated images: NCHW.
    gen_img_score = jax.random.normal(k1, (2, 4, 16, 16), dtype=jnp.float32)
    loss = generator_loss(gen_img_score, min_pallas_elements=0)  # force kernel
    jax.block_until_ready(loss)
    ref = -jnp.mean(gen_img_score)
    assert jnp.allclose(loss, ref, atol=1e-6, rtol=1e-5), (loss, ref)

    # Ragged element count: aligned-prefix kernel + wrapper-side tail sum.
    y = jax.random.normal(k2, (3, 5, 7, 11), dtype=jnp.float32)
    loss_y = generator_loss(y, min_pallas_elements=0)
    ref_y = -jnp.mean(y)
    assert jnp.allclose(loss_y, ref_y, atol=1e-6, rtol=1e-5), (loss_y, ref_y)

    # Multi-tile, 2-slice grid with a padded (masked/clamped) trailing tile:
    # tiny tile budget so this small input spans an odd number of tiles.
    z = jax.random.normal(k3, (2, 4, 16, 24), dtype=jnp.float32)
    loss_z = generator_loss(z, min_pallas_elements=0, target_tile_bytes=4096)
    ref_z = -jnp.mean(z)
    assert jnp.allclose(loss_z, ref_z, atol=1e-6, rtol=1e-5), (loss_z, ref_z)

    # Default small-input fast path still matches.
    loss_fast = generator_loss(gen_img_score)
    assert jnp.allclose(loss_fast, ref, atol=1e-6, rtol=1e-5), (loss_fast, ref)

    jax.block_until_ready((loss, loss_y, loss_z, loss_fast))
    print("KERNEL_OK")
</pallas_src>

<mosaic_0001>
module attributes {stable_mosaic.version = 11 : i64} {
  func.func @_partial_sum_kernel(%arg0: i32, %arg1: i32, %arg2: memref<16x128xf32, #tpu.memory_space<vmem>>, %arg3: memref<1x16x128xf32, #tpu.memory_space<vmem>>) attributes {dimension_semantics = [#tpu.dimension_semantics<parallel>, #tpu.dimension_semantics<arbitrary>], iteration_bounds = array<i64: 1, 1>, scalar_prefetch = 0 : i64, scratch_operands = 0 : i64, tpu.core_type = #tpu.core_type<tc>, window_params = [{transform_indices = @transform_0, window_bounds = array<i64: 16, 128>}, {transform_indices = @transform_1, window_bounds = array<i64: 1, 16, 128>}]} {
    %c0_i32 = arith.constant 0 : i32
    %0 = arith.cmpi eq, %arg1, %c0_i32 : i32
    %1 = arith.extui %0 : i1 to i32
    %c0_i32_0 = arith.constant 0 : i32
    %2 = arith.cmpi ne, %1, %c0_i32_0 : i32
    scf.if %2 {
      %cst_8 = arith.constant 0.000000e+00 : f32
      %10 = vector.broadcast %cst_8 : f32 to vector<1x16x128xf32>
      %c0_9 = arith.constant 0 : index
      %c0_10 = arith.constant 0 : index
      %c0_11 = arith.constant 0 : index
      %11 = vector.load %arg3[%c0_9, %c0_10, %c0_11] : memref<1x16x128xf32, #tpu.memory_space<vmem>>, vector<1x16x128xf32>
      tpu.vector_store %arg3[%c0_9, %c0_10, %c0_11], %10 {strides = array<i32>} : memref<1x16x128xf32, #tpu.memory_space<vmem>>, vector<1x16x128xf32>,
    } else {
    }
    %c0 = arith.constant 0 : index
    %c0_1 = arith.constant 0 : index
    %3 = vector.load %arg2[%c0, %c0_1] : memref<16x128xf32, #tpu.memory_space<vmem>>, vector<16x128xf32>
    %c0_2 = arith.constant 0 : index
    %c0_3 = arith.constant 0 : index
    %c0_4 = arith.constant 0 : index
    %4 = vector.load %arg3[%c0_2, %c0_3, %c0_4] : memref<1x16x128xf32, #tpu.memory_space<vmem>>, vector<1x16x128xf32>
    %5 = vector.shape_cast %3 : vector<16x128xf32> to vector<1x16x128xf32>
    %cst = arith.constant dense<0.000000e+00> : vector<16x128xf32>
    %6 = vector.multi_reduction <add>, %5, %cst [0] : vector<1x16x128xf32> to vector<16x128xf32>
    %7 = vector.shape_cast %6 : vector<16x128xf32> to vector<1x16x128xf32>
    %8 = arith.addf %4, %7 : vector<1x16x128xf32>
    %c0_5 = arith.constant 0 : index
    %c0_6 = arith.constant 0 : index
    %c0_7 = arith.constant 0 : index
    %9 = vector.load %arg3[%c0_5, %c0_6, %c0_7] : memref<1x16x128xf32, #tpu.memory_space<vmem>>, vector<1x16x128xf32>
    tpu.vector_store %arg3[%c0_5, %c0_6, %c0_7], %8 {strides = array<i32>} : memref<1x16x128xf32, #tpu.memory_space<vmem>>, vector<1x16x128xf32>,
    return
  }
  func.func @transform_0(%arg0: i32, %arg1: i32) -> (i32, i32) {
    %c1_i32 = arith.constant 1 : i32
    %0 = arith.muli %arg0, %c1_i32 : i32
    %1 = arith.addi %0, %arg1 : i32
    %c0_i32 = arith.constant 0 : i32
    %c0_i32_0 = arith.constant 0 : i32
    return %1, %c0_i32 : i32, i32
  }
  func.func @transform_1(%arg0: i32, %arg1: i32) -> (i32, i32, i32) {
    %c0_i32 = arith.constant 0 : i32
    %c0_i32_0 = arith.constant 0 : i32
    %c0_i32_1 = arith.constant 0 : i32
    return %arg0, %c0_i32, %c0_i32_0 : i32, i32, i32
  }
}

</mosaic_0001>

<llo_original>
// kernel: tpu_custom_call.1
$region0: #{tpu_custom_call.1}
  #allocation0 [shape = 'u32[]', space=smem, size = 0x4, offset = 0x4, fixed_abs, tag = 'smem constant byte address 0x4 - core index']
  #allocation1 [shape = 'u32[72,128]{1,0:T(1,128)}', space=vmem, size = 0x9000, scoped, tag = 'internal scratch']
  %s0 = inlined_call_operand.hbm [shape: f32[16,128], index: 0, kind: input, shape index: {}]
  %s1 = inlined_call_operand.hbm [shape: f32[1,16,128], index: 1, kind: output, shape index: {}]
  %s2 = sld [smem:[#allocation0]]
  $region22: #{tpu_custom_call.1} parent=0
    _
  %s4 = ssub.s32 1, %s2
  %s5 = scalar_select 0, %s4, %s2
  $region1: #{tpu_custom_call.1} parent=0
    #allocation2 [shape = 'u8[8192]{0}', space=vmem, size = 0x2000, scoped, tag = 'input window, operand 0, single buffered']
    #allocation3 [shape = 's32[1]{0}', space=sflag, size = 0x4, scoped, tag = 'scoped memory for tpu_custom_call.1']
    #allocation4 [shape = 's32[1]{0}', space=sflag, size = 0x4, scoped, tag = 'scoped memory for tpu_custom_call.1']
    #allocation5 [shape = 'u8[8192]{0}', space=vmem, size = 0x2000, scoped, tag = 'output window, operand 0, single buffered']
    %6 = vsyncpa [#allocation3], 0
    %7 = vsyncpa [#allocation4], 0
    // Predicated region
    $region2: #{tpu_custom_call.1} parent=1 // pred_check
      _
    $region3: #{tpu_custom_call.1} parent=1 // pred_check_branch
      %9 = sbr.rel (0) target = $region5
    $region4: #{tpu_custom_call.1} parent=1 // pred_region
      %s10 = sadd.s32 0, 0
      %s11 = smul.u32 2, %s10
      %13 = vsyncadd [#allocation3], 0
      %s14 = smul.addr %s11, 8
      %s15 = scalar_lea.hbm %s0, %s14
      %s16 = sshll.u32 %s15, 4
      %s17 = int_to_ptr.hbm [resolvable:$true] %s16
      %s18 = sshll.u32 [#allocation2], 4
      %s19 = int_to_ptr.vmem [resolvable:$true] %s18
      %24 = dma.hbm_to_vmem [thread:$0]  %s17, 256, %s19, [#allocation3], 128, 128, 8
    $region5: #{tpu_custom_call.1} parent=1 // pred_fallthru
      _
    // Predicated region
    $region6: #{tpu_custom_call.1} parent=1 // pred_check
      _
    $region7: #{tpu_custom_call.1} parent=1 // pred_check_branch
      %26 = sbr.rel (0) target = $region9
    $region8: #{tpu_custom_call.1} parent=1 // pred_region
      %28 = dma.done [#allocation3], 256
    $region9: #{tpu_custom_call.1} parent=1 // pred_fallthru
      _
    %s29 = sadd.s32 0, 0
    %s30 = smul.u32 2, %s29
    %p31 = scmp.eq.s32.totalorder 0, 0
    // Predicated region
    $region10: #{tpu_custom_call.1} parent=1 // pred_check
      %p32 = pneg %p31
    $region11: #{tpu_custom_call.1} parent=1 // pred_check_branch
      %34 = sbr.rel (%p32) target = $region13
    $region12: #{tpu_custom_call.1} parent=1 // pred_region
      %35 = vst [vmem:[#allocation5] sm:$0xff] 0.0
      %36 = vst [vmem:[#allocation5 + $0x8] sm:$0xff] 0.0
    $region13: #{tpu_custom_call.1} parent=1 // pred_fallthru
      _
    %v37 = vld [vmem:[#allocation2] sm:$0xff]
    %v38 = vld [vmem:[#allocation2 + $0x8] sm:$0xff]
    %v39 = vld [vmem:[#allocation5] sm:$0xff]
    %v40 = vld [vmem:[#allocation5 + $0x8] sm:$0xff]
    %v41 = vadd.f32 %v37, 0.0
    %v42 = vadd.f32 %v38, 0.0
    %v43 = vadd.f32 %v39, %v41
    %v44 = vadd.f32 %v40, %v42
    %45 = vst [vmem:[#allocation5] sm:$0xff] %v43
    %46 = vst [vmem:[#allocation5 + $0x8] sm:$0xff] %v44
    // Predicated region
    $region14: #{tpu_custom_call.1} parent=1 // pred_check
      _
    $region15: #{tpu_custom_call.1} parent=1 // pred_check_branch
      %48 = sbr.rel (0) target = $region17
    $region16: #{tpu_custom_call.1} parent=1 // pred_region
      %50 = vsyncadd [#allocation4], 0
      %s51 = sshll.u32 [#allocation5], 4
      %s52 = int_to_ptr.vmem [resolvable:$true] %s51
      %s53 = sshll.u32 %s1, 4
      %s54 = int_to_ptr.hbm [resolvable:$true] %s53
      %59 = dma.vmem_to_hbm [thread:$0]  %s52, 256, %s54, [#allocation4], 128, 128, 8
    $region17: #{tpu_custom_call.1} parent=1 // pred_fallthru
      _
    // Predicated region
    $region18: #{tpu_custom_call.1} parent=1 // pred_check
      _
    $region19: #{tpu_custom_call.1} parent=1 // pred_check_branch
      %61 = sbr.rel (0) target = $region21
    $region20: #{tpu_custom_call.1} parent=1 // pred_region
      %63 = dma.done [#allocation4], 256
    $region21: #{tpu_custom_call.1} parent=1 // pred_fallthru
      _
    %64 = vsyncpa [#allocation3], 1
    %65 = vsyncpa [#allocation4], 1

</llo_original>
